<compile_context>
chip_gen: v7x
topology: tpu7x:2x2x1
jax: 0.10.0
libtpu: 0.0.40
codegen_flags: <defaults>
</compile_context>

<pallas_src>
import jax
import jax.numpy as jnp
from jax.experimental import pallas as pl
from jax.experimental.pallas import tpu as pltpu


def _round_up(a, b):
    return (a + b - 1) // b * b


def _mlp_kernel(x_ref,
                w1_ref, b1_ref,
                w2_ref, b2_ref,
                w3_ref, b3_ref,
                w4_ref, b4_ref,
                o_ref):
    """One batch tile: 3x (Linear + ReLU), Linear, log_softmax(dim=1).

    x arrives f32 and is cast to bf16 here; matmuls run bf16 x bf16 -> f32 on
    the MXU; bias add, ReLU and log_softmax stay in f32.
    """
    x = x_ref[...].astype(jnp.bfloat16)  # in-kernel cast: x costs 4 B/elem once

    # fc1 + relu
    h = jnp.dot(x, w1_ref[...], preferred_element_type=jnp.float32) + b1_ref[...]
    h = jnp.maximum(h, 0.0).astype(jnp.bfloat16)

    # fc2 + relu
    h = jnp.dot(h, w2_ref[...], preferred_element_type=jnp.float32) + b2_ref[...]
    h = jnp.maximum(h, 0.0).astype(jnp.bfloat16)

    # fc3 + relu (output dim zero-padded to 128 -> lane-dense, ReLU keeps pads 0)
    h = jnp.dot(h, w3_ref[...], preferred_element_type=jnp.float32) + b3_ref[...]
    h = jnp.maximum(h, 0.0).astype(jnp.bfloat16)

    # fc4 logits (f32).  Padded class lanes carry a -1e30 bias -> exp()==0.
    logits = jnp.dot(h, w4_ref[...], preferred_element_type=jnp.float32) + b4_ref[...]

    # log_softmax along the class dim (f32), stored as bf16.
    m = jnp.max(logits, axis=-1, keepdims=True)
    shifted = logits - m
    lse = jnp.log(jnp.sum(jnp.exp(shifted), axis=-1, keepdims=True))
    o_ref[...] = (shifted - lse).astype(o_ref.dtype)


def _pick_batch_tile(n, nbentre):
    """Batch tile: MXU/VMEM friendly; >=2 grid steps for v7x megacore."""
    if n <= 8:
        # Single block whose sublane dim equals the full array dim (legal),
        # avoids any partial-block handling for tiny batches.
        return n
    # Cap the f32 x tile at ~4 MiB so double/triple buffering + weights +
    # intermediates fit every generation's scoped VMEM (binding: v7x 64 MiB).
    rows_fit = max(8, ((4 << 20) // (nbentre * 4)) // 8 * 8)
    tb = min(1024, rows_fit, _round_up(n, 8))
    # Ensure the "parallel" batch axis has >=2 steps when the batch allows it,
    # so both v7x TensorCores get work (no-op on v5e/v6e).
    if _round_up(n, 8) > 16 and pl.cdiv(n, tb) < 2:
        tb = _round_up(pl.cdiv(n, 2), 8)
    return tb


@jax.jit
def classifieur_forward(x_nchw, params):
    """Classifieur forward pass as a single batch-tiled Pallas kernel.

    Args:
      x_nchw: float32 array of shape (N, C, H, W).
      params: dict with transposed weights w1..w4 (in, out) and biases b1..b4 (1, out).
    Returns:
      (N, nbclass) float32 log-probabilities.
    """
    n = x_nchw.shape[0]
    x_flat = x_nchw.reshape(n, -1)            # == x.view(N, -1), stays f32
    nbentre = x_flat.shape[1]

    w1, b1 = params["w1"], params["b1"]
    w2, b2 = params["w2"], params["b2"]
    w3, b3 = params["w3"], params["b3"]
    w4, b4 = params["w4"], params["b4"]
    h1, h2, h3 = w1.shape[1], w2.shape[1], w3.shape[1]
    nbclass = w4.shape[1]

    tb = _pick_batch_tile(n, nbentre)
    num_tiles = pl.cdiv(n, tb)
    n_rows_out = num_tiles * tb               # out rows (>= n); sliced to [:n]

    # ---- bf16 matmul operands (f32 accumulation in-kernel); f32 biases.
    w1b, w2b = w1.astype(jnp.bfloat16), w2.astype(jnp.bfloat16)
    b1f, b2f = b1.astype(jnp.float32), b2.astype(jnp.float32)

    # ---- pad fc3 output / fc4 input dim (64 -> 128) for lane-dense vregs.
    h3p = _round_up(h3, 128)
    w3bp = jnp.zeros((h2, h3p), jnp.bfloat16).at[:, :h3].set(w3.astype(jnp.bfloat16))
    b3p = jnp.zeros((1, h3p), jnp.float32).at[:, :h3].set(b3.astype(jnp.float32))

    # ---- pad class dim to a multiple of 128 for lane-dense output stores.
    nc_pad = _round_up(nbclass, 128)
    w4p = jnp.zeros((h3p, nc_pad), jnp.bfloat16).at[:h3, :nbclass].set(
        w4.astype(jnp.bfloat16))
    b4p = jnp.full((1, nc_pad), -1e30, jnp.float32).at[:, :nbclass].set(
        b4.astype(jnp.float32))

    resident = lambda a: pl.BlockSpec(a.shape, lambda i: (0,) * a.ndim)

    if num_tiles >= 3:
        x_spec = pl.BlockSpec((tb, nbentre), lambda i: (i, 0),
                              pipeline_mode=pl.Buffered(3))
    else:
        x_spec = pl.BlockSpec((tb, nbentre), lambda i: (i, 0))

    flops = 2 * n_rows_out * (nbentre * h1 + h1 * h2 + h2 * h3p + h3p * nc_pad)
    bytes_accessed = (
        x_flat.size * 4
        + (w1b.size + w2b.size + w3bp.size + w4p.size) * 2
        + (b1f.size + b2f.size + b3p.size + b4p.size) * 4
        + n_rows_out * nc_pad * 2)

    out = pl.pallas_call(
        _mlp_kernel,
        out_shape=jax.ShapeDtypeStruct((n_rows_out, nc_pad), jnp.bfloat16),
        grid=(num_tiles,),
        in_specs=[
            x_spec,                                  # x: batch-tiled, f32 in HBM
            resident(w1b), resident(b1f),
            resident(w2b), resident(b2f),
            resident(w3bp), resident(b3p),
            resident(w4p), resident(b4p),
        ],
        out_specs=pl.BlockSpec((tb, nc_pad), lambda i: (i, 0)),
        compiler_params=pltpu.CompilerParams(
            dimension_semantics=("parallel",),
            vmem_limit_bytes=48 * 1024 * 1024),
        cost_estimate=pl.CostEstimate(
            flops=flops,
            transcendentals=n_rows_out * nc_pad,
            bytes_accessed=bytes_accessed),
    )(x_flat, w1b, b1f, w2b, b2f, w3bp, b3p, w4p, b4p)

    # Slice off padded rows / class lanes; return f32 like the PyTorch module.
    return out[:n, :nbclass].astype(jnp.float32)


def init_params(key, nbentre, nbclass):
    """Deterministic init mimicking nn.Linear default (uniform +/- 1/sqrt(fan_in)).

    Weights are stored transposed: (in_features, out_features).
    Biases are stored as (1, out_features) for 2-D VMEM broadcasting.
    """
    dims = [nbentre, 256, 128, 64, nbclass]
    params = {}
    for i in range(4):
        fan_in, fan_out = dims[i], dims[i + 1]
        key, kw, kb = jax.random.split(key, 3)
        bound = 1.0 / (fan_in ** 0.5)
        params[f"w{i+1}"] = jax.random.uniform(
            kw, (fan_in, fan_out), jnp.float32, minval=-bound, maxval=bound)
        params[f"b{i+1}"] = jax.random.uniform(
            kb, (1, fan_out), jnp.float32, minval=-bound, maxval=bound)
    return params


def _reference_forward(x_nchw, params):
    """Pure-JAX f32 reference for a loose numerical sanity check."""
    x = x_nchw.reshape(x_nchw.shape[0], -1)
    h = jnp.maximum(x @ params["w1"] + params["b1"], 0.0)
    h = jnp.maximum(h @ params["w2"] + params["b2"], 0.0)
    h = jnp.maximum(h @ params["w3"] + params["b3"], 0.0)
    logits = h @ params["w4"] + params["b4"]
    return jax.nn.log_softmax(logits, axis=-1)


if __name__ == "__main__":
    key = jax.random.PRNGKey(0)
    k_x, k_p = jax.random.split(key)

    # Small shapes consistent with the module: batch=2, C=4, H=W=16
    # -> nbentre = 4*16*16 = 1024 after flattening; nbclass = 10.
    N, C, H, W = 2, 4, 16, 16
    nbentre = C * H * W
    nbclass = 10

    x = jax.random.normal(k_x, (N, C, H, W), dtype=jnp.float32)
    params = init_params(k_p, nbentre, nbclass)

    out = classifieur_forward(x, params)
    out = jax.block_until_ready(out)

    # Sanity: shape, log_softmax rows exp-sum to ~1 (bf16 output -> loose tol),
    # and loose match to the f32 reference (bf16 matmul operands).
    assert out.shape == (N, nbclass)
    row_sums = jnp.exp(out).sum(axis=1)
    assert bool(jnp.all(jnp.abs(row_sums - 1.0) < 2e-2))
    ref = _reference_forward(x, params)
    assert bool(jnp.all(jnp.abs(out - ref) < 0.25))

    print("KERNEL_OK")
</pallas_src>

<mosaic_0001>
module attributes {stable_mosaic.version = 11 : i64} {
  func.func @_mlp_kernel(%arg0: i32, %arg1: memref<2x1024xf32, #tpu.memory_space<vmem>>, %arg2: memref<1024x256xbf16, #tpu.memory_space<vmem>>, %arg3: memref<1x256xf32, #tpu.memory_space<vmem>>, %arg4: memref<256x128xbf16, #tpu.memory_space<vmem>>, %arg5: memref<1x128xf32, #tpu.memory_space<vmem>>, %arg6: memref<128x128xbf16, #tpu.memory_space<vmem>>, %arg7: memref<1x128xf32, #tpu.memory_space<vmem>>, %arg8: memref<128x128xbf16, #tpu.memory_space<vmem>>, %arg9: memref<1x128xf32, #tpu.memory_space<vmem>>, %arg10: memref<2x128xbf16, #tpu.memory_space<vmem>>) attributes {dimension_semantics = [#tpu.dimension_semantics<parallel>], iteration_bounds = array<i64: 1>, scalar_prefetch = 0 : i64, scratch_operands = 0 : i64, tpu.core_type = #tpu.core_type<tc>, window_params = [{transform_indices = @transform_0, window_bounds = array<i64: 2, 1024>}, {pipeline_mode = #tpu.pipeline_mode<synchronous>, transform_indices = @transform_1, window_bounds = array<i64: 1024, 256>}, {pipeline_mode = #tpu.pipeline_mode<synchronous>, transform_indices = @transform_2, window_bounds = array<i64: 1, 256>}, {pipeline_mode = #tpu.pipeline_mode<synchronous>, transform_indices = @transform_3, window_bounds = array<i64: 256, 128>}, {pipeline_mode = #tpu.pipeline_mode<synchronous>, transform_indices = @transform_4, window_bounds = array<i64: 1, 128>}, {pipeline_mode = #tpu.pipeline_mode<synchronous>, transform_indices = @transform_5, window_bounds = array<i64: 128, 128>}, {pipeline_mode = #tpu.pipeline_mode<synchronous>, transform_indices = @transform_6, window_bounds = array<i64: 1, 128>}, {pipeline_mode = #tpu.pipeline_mode<synchronous>, transform_indices = @transform_7, window_bounds = array<i64: 128, 128>}, {pipeline_mode = #tpu.pipeline_mode<synchronous>, transform_indices = @transform_8, window_bounds = array<i64: 1, 128>}, {transform_indices = @transform_9, window_bounds = array<i64: 2, 128>}]} {
    %c0 = arith.constant 0 : index
    %c0_0 = arith.constant 0 : index
    %0 = vector.load %arg1[%c0, %c0_0] : memref<2x1024xf32, #tpu.memory_space<vmem>>, vector<2x1024xf32>
    %1 = arith.truncf %0 : vector<2x1024xf32> to vector<2x1024xbf16>
    %c0_1 = arith.constant 0 : index
    %c0_2 = arith.constant 0 : index
    %2 = vector.load %arg2[%c0_1, %c0_2] : memref<1024x256xbf16, #tpu.memory_space<vmem>>, vector<1024x256xbf16>
    %cst = arith.constant dense<0.000000e+00> : vector<2x256xf32>
    %3 = tpu.matmul %1, %2, %cst {dimension_numbers = #tpu.dot_dimension_numbers<[1], [0], [0], [1], [0, 0, 1, 1], [], []>} : vector<2x1024xbf16>, vector<1024x256xbf16>, vector<2x256xf32> -> vector<2x256xf32>
    %c0_3 = arith.constant 0 : index
    %c0_4 = arith.constant 0 : index
    %4 = vector.load %arg3[%c0_3, %c0_4] : memref<1x256xf32, #tpu.memory_space<vmem>>, vector<1x256xf32>
    %5 = vector.broadcast %4 : vector<1x256xf32> to vector<2x256xf32>
    %6 = arith.addf %3, %5 : vector<2x256xf32>
    %cst_5 = arith.constant 0.000000e+00 : f32
    %7 = vector.broadcast %cst_5 : f32 to vector<2x256xf32>
    %8 = arith.maximumf %6, %7 : vector<2x256xf32>
    %9 = arith.truncf %8 : vector<2x256xf32> to vector<2x256xbf16>
    %c0_6 = arith.constant 0 : index
    %c0_7 = arith.constant 0 : index
    %10 = vector.load %arg4[%c0_6, %c0_7] : memref<256x128xbf16, #tpu.memory_space<vmem>>, vector<256x128xbf16>
    %cst_8 = arith.constant dense<0.000000e+00> : vector<2x128xf32>
    %11 = tpu.matmul %9, %10, %cst_8 {dimension_numbers = #tpu.dot_dimension_numbers<[1], [0], [0], [1], [0, 0, 1, 1], [], []>} : vector<2x256xbf16>, vector<256x128xbf16>, vector<2x128xf32> -> vector<2x128xf32>
    %c0_9 = arith.constant 0 : index
    %c0_10 = arith.constant 0 : index
    %12 = vector.load %arg5[%c0_9, %c0_10] : memref<1x128xf32, #tpu.memory_space<vmem>>, vector<1x128xf32>
    %13 = vector.broadcast %12 : vector<1x128xf32> to vector<2x128xf32>
    %14 = arith.addf %11, %13 : vector<2x128xf32>
    %cst_11 = arith.constant 0.000000e+00 : f32
    %15 = vector.broadcast %cst_11 : f32 to vector<2x128xf32>
    %16 = arith.maximumf %14, %15 : vector<2x128xf32>
    %17 = arith.truncf %16 : vector<2x128xf32> to vector<2x128xbf16>
    %c0_12 = arith.constant 0 : index
    %c0_13 = arith.constant 0 : index
    %18 = vector.load %arg6[%c0_12, %c0_13] : memref<128x128xbf16, #tpu.memory_space<vmem>>, vector<128x128xbf16>
    %cst_14 = arith.constant dense<0.000000e+00> : vector<2x128xf32>
    %19 = tpu.matmul %17, %18, %cst_14 {dimension_numbers = #tpu.dot_dimension_numbers<[1], [0], [0], [1], [0, 0, 1, 1], [], []>} : vector<2x128xbf16>, vector<128x128xbf16>, vector<2x128xf32> -> vector<2x128xf32>
    %c0_15 = arith.constant 0 : index
    %c0_16 = arith.constant 0 : index
    %20 = vector.load %arg7[%c0_15, %c0_16] : memref<1x128xf32, #tpu.memory_space<vmem>>, vector<1x128xf32>
    %21 = vector.broadcast %20 : vector<1x128xf32> to vector<2x128xf32>
    %22 = arith.addf %19, %21 : vector<2x128xf32>
    %cst_17 = arith.constant 0.000000e+00 : f32
    %23 = vector.broadcast %cst_17 : f32 to vector<2x128xf32>
    %24 = arith.maximumf %22, %23 : vector<2x128xf32>
    %25 = arith.truncf %24 : vector<2x128xf32> to vector<2x128xbf16>
    %c0_18 = arith.constant 0 : index
    %c0_19 = arith.constant 0 : index
    %26 = vector.load %arg8[%c0_18, %c0_19] : memref<128x128xbf16, #tpu.memory_space<vmem>>, vector<128x128xbf16>
    %cst_20 = arith.constant dense<0.000000e+00> : vector<2x128xf32>
    %27 = tpu.matmul %25, %26, %cst_20 {dimension_numbers = #tpu.dot_dimension_numbers<[1], [0], [0], [1], [0, 0, 1, 1], [], []>} : vector<2x128xbf16>, vector<128x128xbf16>, vector<2x128xf32> -> vector<2x128xf32>
    %c0_21 = arith.constant 0 : index
    %c0_22 = arith.constant 0 : index
    %28 = vector.load %arg9[%c0_21, %c0_22] : memref<1x128xf32, #tpu.memory_space<vmem>>, vector<1x128xf32>
    %29 = vector.broadcast %28 : vector<1x128xf32> to vector<2x128xf32>
    %30 = arith.addf %27, %29 : vector<2x128xf32>
    %cst_23 = arith.constant dense<0xFF800000> : vector<2xf32>
    %31 = vector.multi_reduction <maximumf>, %30, %cst_23 [1] : vector<2x128xf32> to vector<2xf32>
    %32 = vector.shape_cast %31 : vector<2xf32> to vector<2x1xf32>
    %33 = vector.broadcast %32 : vector<2x1xf32> to vector<2x128xf32>
    %34 = arith.subf %30, %33 : vector<2x128xf32>
    %35 = math.exp %34 : vector<2x128xf32>
    %cst_24 = arith.constant dense<0.000000e+00> : vector<2xf32>
    %36 = vector.multi_reduction <add>, %35, %cst_24 [1] : vector<2x128xf32> to vector<2xf32>
    %37 = vector.shape_cast %36 : vector<2xf32> to vector<2x1xf32>
    %38 = math.log %37 : vector<2x1xf32>
    %39 = vector.broadcast %38 : vector<2x1xf32> to vector<2x128xf32>
    %40 = arith.subf %34, %39 : vector<2x128xf32>
    %41 = arith.truncf %40 : vector<2x128xf32> to vector<2x128xbf16>
    %c0_25 = arith.constant 0 : index
    %c0_26 = arith.constant 0 : index
    %42 = vector.load %arg10[%c0_25, %c0_26] : memref<2x128xbf16, #tpu.memory_space<vmem>>, vector<2x128xbf16>
    tpu.vector_store %arg10[%c0_25, %c0_26], %41 {strides = array<i32>} : memref<2x128xbf16, #tpu.memory_space<vmem>>, vector<2x128xbf16>,
    return
  }
  func.func @transform_0(%arg0: i32) -> (i32, i32) {
    %c0_i32 = arith.constant 0 : i32
    %c0_i32_0 = arith.constant 0 : i32
    return %arg0, %c0_i32 : i32, i32
  }
  func.func @transform_1(%arg0: i32) -> (i32, i32) {
    %c0_i32 = arith.constant 0 : i32
    %c0_i32_0 = arith.constant 0 : i32
    %c0_i32_1 = arith.constant 0 : i32
    return %c0_i32, %c0_i32_0 : i32, i32
  }
  func.func @transform_2(%arg0: i32) -> (i32, i32) {
    %c0_i32 = arith.constant 0 : i32
    %c0_i32_0 = arith.constant 0 : i32
    %c0_i32_1 = arith.constant 0 : i32
    return %c0_i32, %c0_i32_0 : i32, i32
  }
  func.func @transform_3(%arg0: i32) -> (i32, i32) {
    %c0_i32 = arith.constant 0 : i32
    %c0_i32_0 = arith.constant 0 : i32
    %c0_i32_1 = arith.constant 0 : i32
    return %c0_i32, %c0_i32_0 : i32, i32
  }
  func.func @transform_4(%arg0: i32) -> (i32, i32) {
    %c0_i32 = arith.constant 0 : i32
    %c0_i32_0 = arith.constant 0 : i32
    %c0_i32_1 = arith.constant 0 : i32
    return %c0_i32, %c0_i32_0 : i32, i32
  }
  func.func @transform_5(%arg0: i32) -> (i32, i32) {
    %c0_i32 = arith.constant 0 : i32
    %c0_i32_0 = arith.constant 0 : i32
    %c0_i32_1 = arith.constant 0 : i32
    return %c0_i32, %c0_i32_0 : i32, i32
  }
  func.func @transform_6(%arg0: i32) -> (i32, i32) {
    %c0_i32 = arith.constant 0 : i32
    %c0_i32_0 = arith.constant 0 : i32
    %c0_i32_1 = arith.constant 0 : i32
    return %c0_i32, %c0_i32_0 : i32, i32
  }
  func.func @transform_7(%arg0: i32) -> (i32, i32) {
    %c0_i32 = arith.constant 0 : i32
    %c0_i32_0 = arith.constant 0 : i32
    %c0_i32_1 = arith.constant 0 : i32
    return %c0_i32, %c0_i32_0 : i32, i32
  }
  func.func @transform_8(%arg0: i32) -> (i32, i32) {
    %c0_i32 = arith.constant 0 : i32
    %c0_i32_0 = arith.constant 0 : i32
    %c0_i32_1 = arith.constant 0 : i32
    return %c0_i32, %c0_i32_0 : i32, i32
  }
  func.func @transform_9(%arg0: i32) -> (i32, i32) {
    %c0_i32 = arith.constant 0 : i32
    %c0_i32_0 = arith.constant 0 : i32
    return %arg0, %c0_i32 : i32, i32
  }
}

</mosaic_0001>

<llo_original>
// kernel: classifieur_forward.1
$region0: #{classifieur_forward.1}
  #allocation0 [shape = 'u32[]', space=smem, size = 0x4, offset = 0x4, fixed_abs, tag = 'smem constant byte address 0x4 - core index']
  #allocation1 [shape = 'u32[144,128]{1,0:T(1,128)}', space=vmem, size = 0x12000, scoped, tag = 'internal scratch']
  %s0 = inlined_call_operand.vmem [shape: f32[2,1024], index: 0, kind: input, shape index: {}]
  %s1 = inlined_call_operand.vmem [shape: bf16[1024,256], index: 1, kind: input, shape index: {}]
  %s2 = inlined_call_operand.vmem [shape: f32[1,256], index: 2, kind: input, shape index: {}]
  %s3 = inlined_call_operand.vmem [shape: bf16[256,128], index: 3, kind: input, shape index: {}]
  %s4 = inlined_call_operand.vmem [shape: f32[1,128], index: 4, kind: input, shape index: {}]
  %s5 = inlined_call_operand.vmem [shape: bf16[128,128], index: 5, kind: input, shape index: {}]
  %s6 = inlined_call_operand.vmem [shape: f32[1,128], index: 6, kind: input, shape index: {}]
  %s7 = inlined_call_operand.vmem [shape: bf16[128,128], index: 7, kind: input, shape index: {}]
  %s8 = inlined_call_operand.vmem [shape: f32[1,128], index: 8, kind: input, shape index: {}]
  %s9 = inlined_call_operand.vmem [shape: bf16[2,128], index: 9, kind: output, shape index: {}]
  %s10 = sld [smem:[#allocation0]]
  $region46: #{classifieur_forward.1} parent=0
    _
  %s12 = ssub.s32 1, %s10
  %s13 = scalar_select 0, %s12, %s10
  // Predicated region
  $region2: #{classifieur_forward.1} parent=0 // pred_check
    _
  $region3: #{classifieur_forward.1} parent=0 // pred_check_branch
    %15 = sbr.rel (0) target = $region5
  $region4: #{classifieur_forward.1} parent=0 // pred_region
    _
  $region5: #{classifieur_forward.1} parent=0 // pred_fallthru
    _
  // Predicated region
  $region6: #{classifieur_forward.1} parent=0 // pred_check
    _
  $region7: #{classifieur_forward.1} parent=0 // pred_check_branch
    %17 = sbr.rel (0) target = $region9
  $region8: #{classifieur_forward.1} parent=0 // pred_region
    _
  $region9: #{classifieur_forward.1} parent=0 // pred_fallthru
    _
  // Predicated region
  $region10: #{classifieur_forward.1} parent=0 // pred_check
    _
  $region11: #{classifieur_forward.1} parent=0 // pred_check_branch
    %19 = sbr.rel (0) target = $region13
  $region12: #{classifieur_forward.1} parent=0 // pred_region
    _
  $region13: #{classifieur_forward.1} parent=0 // pred_fallthru
    _
  // Predicated region
  $region14: #{classifieur_forward.1} parent=0 // pred_check
    _
  $region15: #{classifieur_forward.1} parent=0 // pred_check_branch
    %21 = sbr.rel (0) target = $region17
  $region16: #{classifieur_forward.1} parent=0 // pred_region
    _
  $region17: #{classifieur_forward.1} parent=0 // pred_fallthru
    _
  // Predicated region
  $region18: #{classifieur_forward.1} parent=0 // pred_check
    _
  $region19: #{classifieur_forward.1} parent=0 // pred_check_branch
    %23 = sbr.rel (0) target = $region21
  $region20: #{classifieur_forward.1} parent=0 // pred_region
    _
  $region21: #{classifieur_forward.1} parent=0 // pred_fallthru
    _
  // Predicated region
  $region22: #{classifieur_forward.1} parent=0 // pred_check
    _
  $region23: #{classifieur_forward.1} parent=0 // pred_check_branch
    %25 = sbr.rel (0) target = $region25
  $region24: #{classifieur_forward.1} parent=0 // pred_region
    _
  $region25: #{classifieur_forward.1} parent=0 // pred_fallthru
    _
  // Predicated region
  $region26: #{classifieur_forward.1} parent=0 // pred_check
    _
  $region27: #{classifieur_forward.1} parent=0 // pred_check_branch
    %27 = sbr.rel (0) target = $region29
  $region28: #{classifieur_forward.1} parent=0 // pred_region
    _
  $region29: #{classifieur_forward.1} parent=0 // pred_fallthru
    _
  // Predicated region
  $region30: #{classifieur_forward.1} parent=0 // pred_check
    _
  $region31: #{classifieur_forward.1} parent=0 // pred_check_branch
    %29 = sbr.rel (0) target = $region33
  $region32: #{classifieur_forward.1} parent=0 // pred_region
    _
  $region33: #{classifieur_forward.1} parent=0 // pred_fallthru
    _
  // Predicated region
  $region34: #{classifieur_forward.1} parent=0 // pred_check
    _
  $region35: #{classifieur_forward.1} parent=0 // pred_check_branch
    %31 = sbr.rel (0) target = $region37
  $region36: #{classifieur_forward.1} parent=0 // pred_region
    _
  $region37: #{classifieur_forward.1} parent=0 // pred_fallthru
    _
  %v33 = vld [vmem:[%s0] sm:$0xff]
  %v34 = vld [vmem:[%s0 + $0x8] sm:$0xff]
  %v37 = vcombine.high %v33, %v33
  %v39 = vunpack.c.l.s4 1983009808
  %v40 = vunpack.c.0.s8 %v39
  %v41 = vlaneseq
  %v42 = vshrl.u32 %v41, 7
  %v43 = vsub.s32 %v40, %v42
  %v44 = vrot.slane %v33, %v43
  %v46 = vunpack.c.l.s4 1983009808
  %v47 = vunpack.c.0.s8 %v46
  %v48 = vlaneseq
  %v49 = vshrl.u32 %v48, 7
  %v50 = vsub.s32 %v47, %v49
  %v51 = vrot.slane %v37, %v50
  %v52 = vcombine.high %v44, %v44
  %v53 = vcombine.high %v51, %v51
  %v54 = vcombine.high %v34, %v34
  %v56 = vunpack.c.l.s4 1983009808
  %v57 = vunpack.c.0.s8 %v56
  %v58 = vlaneseq
  %v59 = vshrl.u32 %v58, 7
  %v60 = vsub.s32 %v57, %v59
  %v61 = vrot.slane %v34, %v60
  %v63 = vunpack.c.l.s4 1983009808
  %v64 = vunpack.c.0.s8 %v63
  %v65 = vlaneseq
  %v66 = vshrl.u32 %v65, 7
  %v67 = vsub.s32 %v64, %v66
  %v68 = vrot.slane %v54, %v67
  %v69 = vcombine.high %v61, %v61
  %v70 = vcombine.high %v68, %v68
  %v79 = vpack.c.bf16 %v44, %v44
  %v80 = vpack.c.bf16 %v52, %v52
  %v81 = vpack.c.bf16 %v51, %v51
  %v82 = vpack.c.bf16 %v53, %v53
  %v83 = vpack.c.bf16 %v61, %v61
  %v84 = vpack.c.bf16 %v69, %v69
  %v85 = vpack.c.bf16 %v68, %v68
  %v86 = vpack.c.bf16 %v70, %v70
  %v87 = vld [vmem:[%s1] sm:$0xff]
  %v88 = vld [vmem:[%s1 + $0x8] sm:$0xff]
  %v89 = vld [vmem:[%s1 + $0x10] sm:$0xff]
  %v90 = vld [vmem:[%s1 + $0x18] sm:$0xff]
  %v91 = vld [vmem:[%s1 + $0x20] sm:$0xff]
  %v92 = vld [vmem:[%s1 + $0x28] sm:$0xff]
  %v93 = vld [vmem:[%s1 + $0x30] sm:$0xff]
  %v94 = vld [vmem:[%s1 + $0x38] sm:$0xff]
  %v95 = vld [vmem:[%s1 + $0x40] sm:$0xff]
  %v96 = vld [vmem:[%s1 + $0x48] sm:$0xff]
  %v97 = vld [vmem:[%s1 + $0x50] sm:$0xff]
  %v98 = vld [vmem:[%s1 + $0x58] sm:$0xff]
  %v99 = vld [vmem:[%s1 + $0x60] sm:$0xff]
  %v100 = vld [vmem:[%s1 + $0x68] sm:$0xff]
  %v101 = vld [vmem:[%s1 + $0x70] sm:$0xff]
  %v102 = vld [vmem:[%s1 + $0x78] sm:$0xff]
  %v103 = vld [vmem:[%s1 + $0x80] sm:$0xff]
  %v104 = vld [vmem:[%s1 + $0x88] sm:$0xff]
  %v105 = vld [vmem:[%s1 + $0x90] sm:$0xff]
  %v106 = vld [vmem:[%s1 + $0x98] sm:$0xff]
  %v107 = vld [vmem:[%s1 + $0xa0] sm:$0xff]
  %v108 = vld [vmem:[%s1 + $0xa8] sm:$0xff]
  %v109 = vld [vmem:[%s1 + $0xb0] sm:$0xff]
  %v110 = vld [vmem:[%s1 + $0xb8] sm:$0xff]
  %v111 = vld [vmem:[%s1 + $0xc0] sm:$0xff]
  %v112 = vld [vmem:[%s1 + $0xc8] sm:$0xff]
  %v113 = vld [vmem:[%s1 + $0xd0] sm:$0xff]
  %v114 = vld [vmem:[%s1 + $0xd8] sm:$0xff]
  %v115 = vld [vmem:[%s1 + $0xe0] sm:$0xff]
  %v116 = vld [vmem:[%s1 + $0xe8] sm:$0xff]
  %v117 = vld [vmem:[%s1 + $0xf0] sm:$0xff]
  %v118 = vld [vmem:[%s1 + $0xf8] sm:$0xff]
  %v119 = vld [vmem:[%s1 + $0x100] sm:$0xff]
  %v120 = vld [vmem:[%s1 + $0x108] sm:$0xff]
  %v121 = vld [vmem:[%s1 + $0x110] sm:$0xff]
  %v122 = vld [vmem:[%s1 + $0x118] sm:$0xff]
  %v123 = vld [vmem:[%s1 + $0x120] sm:$0xff]
  %v124 = vld [vmem:[%s1 + $0x128] sm:$0xff]
  %v125 = vld [vmem:[%s1 + $0x130] sm:$0xff]
  %v126 = vld [vmem:[%s1 + $0x138] sm:$0xff]
  %v127 = vld [vmem:[%s1 + $0x140] sm:$0xff]
  %v128 = vld [vmem:[%s1 + $0x148] sm:$0xff]
  %v129 = vld [vmem:[%s1 + $0x150] sm:$0xff]
  %v130 = vld [vmem:[%s1 + $0x158] sm:$0xff]
  %v131 = vld [vmem:[%s1 + $0x160] sm:$0xff]
  %v132 = vld [vmem:[%s1 + $0x168] sm:$0xff]
  %v133 = vld [vmem:[%s1 + $0x170] sm:$0xff]
  %v134 = vld [vmem:[%s1 + $0x178] sm:$0xff]
  %v135 = vld [vmem:[%s1 + $0x180] sm:$0xff]
  %v136 = vld [vmem:[%s1 + $0x188] sm:$0xff]
  %v137 = vld [vmem:[%s1 + $0x190] sm:$0xff]
  %v138 = vld [vmem:[%s1 + $0x198] sm:$0xff]
  %v139 = vld [vmem:[%s1 + $0x1a0] sm:$0xff]
  %v140 = vld [vmem:[%s1 + $0x1a8] sm:$0xff]
  %v141 = vld [vmem:[%s1 + $0x1b0] sm:$0xff]
  %v142 = vld [vmem:[%s1 + $0x1b8] sm:$0xff]
  %v143 = vld [vmem:[%s1 + $0x1c0] sm:$0xff]
  %v144 = vld [vmem:[%s1 + $0x1c8] sm:$0xff]
  %v145 = vld [vmem:[%s1 + $0x1d0] sm:$0xff]
  %v146 = vld [vmem:[%s1 + $0x1d8] sm:$0xff]
  %v147 = vld [vmem:[%s1 + $0x1e0] sm:$0xff]
  %v148 = vld [vmem:[%s1 + $0x1e8] sm:$0xff]
  %v149 = vld [vmem:[%s1 + $0x1f0] sm:$0xff]
  %v150 = vld [vmem:[%s1 + $0x1f8] sm:$0xff]
  %v151 = vld [vmem:[%s1 + $0x200] sm:$0xff]
  %v152 = vld [vmem:[%s1 + $0x208] sm:$0xff]
  %v153 = vld [vmem:[%s1 + $0x210] sm:$0xff]
  %v154 = vld [vmem:[%s1 + $0x218] sm:$0xff]
  %v155 = vld [vmem:[%s1 + $0x220] sm:$0xff]
  %v156 = vld [vmem:[%s1 + $0x228] sm:$0xff]
  %v157 = vld [vmem:[%s1 + $0x230] sm:$0xff]
  %v158 = vld [vmem:[%s1 + $0x238] sm:$0xff]
  %v159 = vld [vmem:[%s1 + $0x240] sm:$0xff]
  %v160 = vld [vmem:[%s1 + $0x248] sm:$0xff]
  %v161 = vld [vmem:[%s1 + $0x250] sm:$0xff]
  %v162 = vld [vmem:[%s1 + $0x258] sm:$0xff]
  %v163 = vld [vmem:[%s1 + $0x260] sm:$0xff]
  %v164 = vld [vmem:[%s1 + $0x268] sm:$0xff]
  %v165 = vld [vmem:[%s1 + $0x270] sm:$0xff]
  %v166 = vld [vmem:[%s1 + $0x278] sm:$0xff]
  %v167 = vld [vmem:[%s1 + $0x280] sm:$0xff]
  %v168 = vld [vmem:[%s1 + $0x288] sm:$0xff]
  %v169 = vld [vmem:[%s1 + $0x290] sm:$0xff]
  %v170 = vld [vmem:[%s1 + $0x298] sm:$0xff]
  %v171 = vld [vmem:[%s1 + $0x2a0] sm:$0xff]
  %v172 = vld [vmem:[%s1 + $0x2a8] sm:$0xff]
  %v173 = vld [vmem:[%s1 + $0x2b0] sm:$0xff]
  %v174 = vld [vmem:[%s1 + $0x2b8] sm:$0xff]
  %v175 = vld [vmem:[%s1 + $0x2c0] sm:$0xff]
  %v176 = vld [vmem:[%s1 + $0x2c8] sm:$0xff]
  %v177 = vld [vmem:[%s1 + $0x2d0] sm:$0xff]
  %v178 = vld [vmem:[%s1 + $0x2d8] sm:$0xff]
  %v179 = vld [vmem:[%s1 + $0x2e0] sm:$0xff]
  %v180 = vld [vmem:[%s1 + $0x2e8] sm:$0xff]
  %v181 = vld [vmem:[%s1 + $0x2f0] sm:$0xff]
  %v182 = vld [vmem:[%s1 + $0x2f8] sm:$0xff]
  %v183 = vld [vmem:[%s1 + $0x300] sm:$0xff]
  %v184 = vld [vmem:[%s1 + $0x308] sm:$0xff]
  %v185 = vld [vmem:[%s1 + $0x310] sm:$0xff]
  %v186 = vld [vmem:[%s1 + $0x318] sm:$0xff]
  %v187 = vld [vmem:[%s1 + $0x320] sm:$0xff]
  %v188 = vld [vmem:[%s1 + $0x328] sm:$0xff]
  %v189 = vld [vmem:[%s1 + $0x330] sm:$0xff]
  %v190 = vld [vmem:[%s1 + $0x338] sm:$0xff]
  %v191 = vld [vmem:[%s1 + $0x340] sm:$0xff]
  %v192 = vld [vmem:[%s1 + $0x348] sm:$0xff]
  %v193 = vld [vmem:[%s1 + $0x350] sm:$0xff]
  %v194 = vld [vmem:[%s1 + $0x358] sm:$0xff]
  %v195 = vld [vmem:[%s1 + $0x360] sm:$0xff]
  %v196 = vld [vmem:[%s1 + $0x368] sm:$0xff]
  %v197 = vld [vmem:[%s1 + $0x370] sm:$0xff]
  %v198 = vld [vmem:[%s1 + $0x378] sm:$0xff]
  %v199 = vld [vmem:[%s1 + $0x380] sm:$0xff]
  %v200 = vld [vmem:[%s1 + $0x388] sm:$0xff]
  %v201 = vld [vmem:[%s1 + $0x390] sm:$0xff]
  %v202 = vld [vmem:[%s1 + $0x398] sm:$0xff]
  %v203 = vld [vmem:[%s1 + $0x3a0] sm:$0xff]
  %v204 = vld [vmem:[%s1 + $0x3a8] sm:$0xff]
  %v205 = vld [vmem:[%s1 + $0x3b0] sm:$0xff]
  %v206 = vld [vmem:[%s1 + $0x3b8] sm:$0xff]
  %v207 = vld [vmem:[%s1 + $0x3c0] sm:$0xff]
  %v208 = vld [vmem:[%s1 + $0x3c8] sm:$0xff]
  %v209 = vld [vmem:[%s1 + $0x3d0] sm:$0xff]
  %v210 = vld [vmem:[%s1 + $0x3d8] sm:$0xff]
  %v211 = vld [vmem:[%s1 + $0x3e0] sm:$0xff]
  %v212 = vld [vmem:[%s1 + $0x3e8] sm:$0xff]
  %v213 = vld [vmem:[%s1 + $0x3f0] sm:$0xff]
  %v214 = vld [vmem:[%s1 + $0x3f8] sm:$0xff]
  %v215 = vld [vmem:[%s2] sm:$0x3]
  %v217 = vlaneseq
  %v218 = vshrl.u32 %v217, 7
  %v219 = vsub.s32 0, %v218
  %v220 = vrot.slane %v215, %v219
  %v221 = vlaneseq
  %v222 = vshrl.u32 %v221, 7
  %v223 = vsub.s32 1, %v222
  %v224 = vrot.slane %v215, %v223
  %v355 = vunpack.c.l.b16 %v87
  %v356 = vunpack.c.h.b16 %v87
  %v357 = vunpack.c.l.b16 %v88
  %v358 = vunpack.c.h.b16 %v88
  %v359 = vunpack.c.l.b16 %v89
  %v360 = vunpack.c.h.b16 %v89
  %v361 = vunpack.c.l.b16 %v90
  %v362 = vunpack.c.h.b16 %v90
  %v363 = vunpack.c.l.b16 %v91
  %v364 = vunpack.c.h.b16 %v91
  %v365 = vunpack.c.l.b16 %v92
  %v366 = vunpack.c.h.b16 %v92
  %v367 = vunpack.c.l.b16 %v93
  %v368 = vunpack.c.h.b16 %v93
  %v369 = vunpack.c.l.b16 %v94
  %v370 = vunpack.c.h.b16 %v94
  %v371 = vunpack.c.l.b16 %v95
  %v372 = vunpack.c.h.b16 %v95
  %v373 = vunpack.c.l.b16 %v96
  %v374 = vunpack.c.h.b16 %v96
  %v375 = vunpack.c.l.b16 %v97
  %v376 = vunpack.c.h.b16 %v97
  %v377 = vunpack.c.l.b16 %v98
  %v378 = vunpack.c.h.b16 %v98
  %v379 = vunpack.c.l.b16 %v99
  %v380 = vunpack.c.h.b16 %v99
  %v381 = vunpack.c.l.b16 %v100
  %v382 = vunpack.c.h.b16 %v100
  %v383 = vunpack.c.l.b16 %v101
  %v384 = vunpack.c.h.b16 %v101
  %v385 = vunpack.c.l.b16 %v102
  %v386 = vunpack.c.h.b16 %v102
  %v387 = vunpack.c.l.b16 %v103
  %v388 = vunpack.c.h.b16 %v103
  %v389 = vunpack.c.l.b16 %v104
  %v390 = vunpack.c.h.b16 %v104
  %v391 = vunpack.c.l.b16 %v105
  %v392 = vunpack.c.h.b16 %v105
  %v393 = vunpack.c.l.b16 %v106
  %v394 = vunpack.c.h.b16 %v106
  %v395 = vunpack.c.l.b16 %v107
  %v396 = vunpack.c.h.b16 %v107
  %v397 = vunpack.c.l.b16 %v108
  %v398 = vunpack.c.h.b16 %v108
  %v399 = vunpack.c.l.b16 %v109
  %v400 = vunpack.c.h.b16 %v109
  %v401 = vunpack.c.l.b16 %v110
  %v402 = vunpack.c.h.b16 %v110
  %v403 = vunpack.c.l.b16 %v111
  %v404 = vunpack.c.h.b16 %v111
  %v405 = vunpack.c.l.b16 %v112
  %v406 = vunpack.c.h.b16 %v112
  %v407 = vunpack.c.l.b16 %v113
  %v408 = vunpack.c.h.b16 %v113
  %v409 = vunpack.c.l.b16 %v114
  %v410 = vunpack.c.h.b16 %v114
  %v411 = vunpack.c.l.b16 %v115
  %v412 = vunpack.c.h.b16 %v115
  %v413 = vunpack.c.l.b16 %v116
  %v414 = vunpack.c.h.b16 %v116
  %v415 = vunpack.c.l.b16 %v117
  %v416 = vunpack.c.h.b16 %v117
  %v417 = vunpack.c.l.b16 %v118
  %v418 = vunpack.c.h.b16 %v118
  %v419 = vunpack.c.l.b16 %v119
  %v420 = vunpack.c.h.b16 %v119
  %v421 = vunpack.c.l.b16 %v120
  %v422 = vunpack.c.h.b16 %v120
  %v423 = vunpack.c.l.b16 %v121
  %v424 = vunpack.c.h.b16 %v121
  %v425 = vunpack.c.l.b16 %v122
  %v426 = vunpack.c.h.b16 %v122
  %v427 = vunpack.c.l.b16 %v123
  %v428 = vunpack.c.h.b16 %v123
  %v429 = vunpack.c.l.b16 %v124
  %v430 = vunpack.c.h.b16 %v124
  %v431 = vunpack.c.l.b16 %v125
  %v432 = vunpack.c.h.b16 %v125
  %v433 = vunpack.c.l.b16 %v126
  %v434 = vunpack.c.h.b16 %v126
  %v435 = vunpack.c.l.b16 %v127
  %v436 = vunpack.c.h.b16 %v127
  %v437 = vunpack.c.l.b16 %v128
  %v438 = vunpack.c.h.b16 %v128
  %v439 = vunpack.c.l.b16 %v129
  %v440 = vunpack.c.h.b16 %v129
  %v441 = vunpack.c.l.b16 %v130
  %v442 = vunpack.c.h.b16 %v130
  %v443 = vunpack.c.l.b16 %v131
  %v444 = vunpack.c.h.b16 %v131
  %v445 = vunpack.c.l.b16 %v132
  %v446 = vunpack.c.h.b16 %v132
  %v447 = vunpack.c.l.b16 %v133
  %v448 = vunpack.c.h.b16 %v133
  %v449 = vunpack.c.l.b16 %v134
  %v450 = vunpack.c.h.b16 %v134
  %v451 = vunpack.c.l.b16 %v135
  %v452 = vunpack.c.h.b16 %v135
  %v453 = vunpack.c.l.b16 %v136
  %v454 = vunpack.c.h.b16 %v136
  %v455 = vunpack.c.l.b16 %v137
  %v456 = vunpack.c.h.b16 %v137
  %v457 = vunpack.c.l.b16 %v138
  %v458 = vunpack.c.h.b16 %v138
  %v459 = vunpack.c.l.b16 %v139
  %v460 = vunpack.c.h.b16 %v139
  %v461 = vunpack.c.l.b16 %v140
  %v462 = vunpack.c.h.b16 %v140
  %v463 = vunpack.c.l.b16 %v141
  %v464 = vunpack.c.h.b16 %v141
  %v465 = vunpack.c.l.b16 %v142
  %v466 = vunpack.c.h.b16 %v142
  %v467 = vunpack.c.l.b16 %v143
  %v468 = vunpack.c.h.b16 %v143
  %v469 = vunpack.c.l.b16 %v144
  %v470 = vunpack.c.h.b16 %v144
  %v471 = vunpack.c.l.b16 %v145
  %v472 = vunpack.c.h.b16 %v145
  %v473 = vunpack.c.l.b16 %v146
  %v474 = vunpack.c.h.b16 %v146
  %v475 = vunpack.c.l.b16 %v147
  %v476 = vunpack.c.h.b16 %v147
  %v477 = vunpack.c.l.b16 %v148
  %v478 = vunpack.c.h.b16 %v148
  %v479 = vunpack.c.l.b16 %v149
  %v480 = vunpack.c.h.b16 %v149
  %v481 = vunpack.c.l.b16 %v150
  %v482 = vunpack.c.h.b16 %v150
  %v483 = vunpack.c.l.b16 %v151
  %v484 = vunpack.c.h.b16 %v151
  %v485 = vunpack.c.l.b16 %v152
  %v486 = vunpack.c.h.b16 %v152
  %v487 = vunpack.c.l.b16 %v153
  %v488 = vunpack.c.h.b16 %v153
  %v489 = vunpack.c.l.b16 %v154
  %v490 = vunpack.c.h.b16 %v154
  %v491 = vunpack.c.l.b16 %v155
  %v492 = vunpack.c.h.b16 %v155
  %v493 = vunpack.c.l.b16 %v156
  %v494 = vunpack.c.h.b16 %v156
  %v495 = vunpack.c.l.b16 %v157
  %v496 = vunpack.c.h.b16 %v157
  %v497 = vunpack.c.l.b16 %v158
  %v498 = vunpack.c.h.b16 %v158
  %v499 = vunpack.c.l.b16 %v159
  %v500 = vunpack.c.h.b16 %v159
  %v501 = vunpack.c.l.b16 %v160
  %v502 = vunpack.c.h.b16 %v160
  %v503 = vunpack.c.l.b16 %v161
  %v504 = vunpack.c.h.b16 %v161
  %v505 = vunpack.c.l.b16 %v162
  %v506 = vunpack.c.h.b16 %v162
  %v507 = vunpack.c.l.b16 %v163
  %v508 = vunpack.c.h.b16 %v163
  %v509 = vunpack.c.l.b16 %v164
  %v510 = vunpack.c.h.b16 %v164
  %v511 = vunpack.c.l.b16 %v165
  %v512 = vunpack.c.h.b16 %v165
  %v513 = vunpack.c.l.b16 %v166
  %v514 = vunpack.c.h.b16 %v166
  %v515 = vunpack.c.l.b16 %v167
  %v516 = vunpack.c.h.b16 %v167
  %v517 = vunpack.c.l.b16 %v168
  %v518 = vunpack.c.h.b16 %v168
  %v519 = vunpack.c.l.b16 %v169
  %v520 = vunpack.c.h.b16 %v169
  %v521 = vunpack.c.l.b16 %v170
  %v522 = vunpack.c.h.b16 %v170
  %v523 = vunpack.c.l.b16 %v171
  %v524 = vunpack.c.h.b16 %v171
  %v525 = vunpack.c.l.b16 %v172
  %v526 = vunpack.c.h.b16 %v172
  %v527 = vunpack.c.l.b16 %v173
  %v528 = vunpack.c.h.b16 %v173
  %v529 = vunpack.c.l.b16 %v174
  %v530 = vunpack.c.h.b16 %v174
  %v531 = vunpack.c.l.b16 %v175
  %v532 = vunpack.c.h.b16 %v175
  %v533 = vunpack.c.l.b16 %v176
  %v534 = vunpack.c.h.b16 %v176
  %v535 = vunpack.c.l.b16 %v177
  %v536 = vunpack.c.h.b16 %v177
  %v537 = vunpack.c.l.b16 %v178
  %v538 = vunpack.c.h.b16 %v178
  %v539 = vunpack.c.l.b16 %v179
  %v540 = vunpack.c.h.b16 %v179
  %v541 = vunpack.c.l.b16 %v180
  %v542 = vunpack.c.h.b16 %v180
  %v543 = vunpack.c.l.b16 %v181
  %v544 = vunpack.c.h.b16 %v181
  %v545 = vunpack.c.l.b16 %v182
  %v546 = vunpack.c.h.b16 %v182
  %v547 = vunpack.c.l.b16 %v183
  %v548 = vunpack.c.h.b16 %v183
  %v549 = vunpack.c.l.b16 %v184
  %v550 = vunpack.c.h.b16 %v184
  %v551 = vunpack.c.l.b16 %v185
  %v552 = vunpack.c.h.b16 %v185
  %v553 = vunpack.c.l.b16 %v186
  %v554 = vunpack.c.h.b16 %v186
  %v555 = vunpack.c.l.b16 %v187
  %v556 = vunpack.c.h.b16 %v187
  %v557 = vunpack.c.l.b16 %v188
  %v558 = vunpack.c.h.b16 %v188
  %v559 = vunpack.c.l.b16 %v189
  %v560 = vunpack.c.h.b16 %v189
  %v561 = vunpack.c.l.b16 %v190
  %v562 = vunpack.c.h.b16 %v190
  %v563 = vunpack.c.l.b16 %v191
  %v564 = vunpack.c.h.b16 %v191
  %v565 = vunpack.c.l.b16 %v192
  %v566 = vunpack.c.h.b16 %v192
  %v567 = vunpack.c.l.b16 %v193
  %v568 = vunpack.c.h.b16 %v193
  %v569 = vunpack.c.l.b16 %v194
  %v570 = vunpack.c.h.b16 %v194
  %v571 = vunpack.c.l.b16 %v195
  %v572 = vunpack.c.h.b16 %v195
  %v573 = vunpack.c.l.b16 %v196
  %v574 = vunpack.c.h.b16 %v196
  %v575 = vunpack.c.l.b16 %v197
  %v576 = vunpack.c.h.b16 %v197
  %v577 = vunpack.c.l.b16 %v198
  %v578 = vunpack.c.h.b16 %v198
  %v579 = vunpack.c.l.b16 %v199
  %v580 = vunpack.c.h.b16 %v199
  %v581 = vunpack.c.l.b16 %v200
  %v582 = vunpack.c.h.b16 %v200
  %v583 = vunpack.c.l.b16 %v201
  %v584 = vunpack.c.h.b16 %v201
  %v585 = vunpack.c.l.b16 %v202
  %v586 = vunpack.c.h.b16 %v202
  %v587 = vunpack.c.l.b16 %v203
  %v588 = vunpack.c.h.b16 %v203
  %v589 = vunpack.c.l.b16 %v204
  %v590 = vunpack.c.h.b16 %v204
  %v591 = vunpack.c.l.b16 %v205
  %v592 = vunpack.c.h.b16 %v205
  %v593 = vunpack.c.l.b16 %v206
  %v594 = vunpack.c.h.b16 %v206
  %v595 = vunpack.c.l.b16 %v207
  %v596 = vunpack.c.h.b16 %v207
  %v597 = vunpack.c.l.b16 %v208
  %v598 = vunpack.c.h.b16 %v208
  %v599 = vunpack.c.l.b16 %v209
  %v600 = vunpack.c.h.b16 %v209
  %v601 = vunpack.c.l.b16 %v210
  %v602 = vunpack.c.h.b16 %v210
  %v603 = vunpack.c.l.b16 %v211
  %v604 = vunpack.c.h.b16 %v211
  %v605 = vunpack.c.l.b16 %v212
  %v606 = vunpack.c.h.b16 %v212
  %v607 = vunpack.c.l.b16 %v213
  %v608 = vunpack.c.h.b16 %v213
  %v609 = vunpack.c.l.b16 %v214
  %v610 = vunpack.c.h.b16 %v214
  %v611 = vpack.c.b16 %v357, %v355
  %v612 = vpack.c.b16 %v358, %v356
  %v613 = vpack.c.b16 %v361, %v359
  %v614 = vpack.c.b16 %v362, %v360
  %v615 = vpack.c.b16 %v365, %v363
  %v616 = vpack.c.b16 %v366, %v364
  %v617 = vpack.c.b16 %v369, %v367
  %v618 = vpack.c.b16 %v370, %v368
  %v619 = vpack.c.b16 %v373, %v371
  %v620 = vpack.c.b16 %v374, %v372
  %v621 = vpack.c.b16 %v377, %v375
  %v622 = vpack.c.b16 %v378, %v376
  %v623 = vpack.c.b16 %v381, %v379
  %v624 = vpack.c.b16 %v382, %v380
  %v625 = vpack.c.b16 %v385, %v383
  %v626 = vpack.c.b16 %v386, %v384
  %v627 = vpack.c.b16 %v389, %v387
  %v628 = vpack.c.b16 %v390, %v388
  %v629 = vpack.c.b16 %v393, %v391
  %v630 = vpack.c.b16 %v394, %v392
  %v631 = vpack.c.b16 %v397, %v395
  %v632 = vpack.c.b16 %v398, %v396
  %v633 = vpack.c.b16 %v401, %v399
  %v634 = vpack.c.b16 %v402, %v400
  %v635 = vpack.c.b16 %v405, %v403
  %v636 = vpack.c.b16 %v406, %v404
  %v637 = vpack.c.b16 %v409, %v407
  %v638 = vpack.c.b16 %v410, %v408
  %v639 = vpack.c.b16 %v413, %v411
  %v640 = vpack.c.b16 %v414, %v412
  %v641 = vpack.c.b16 %v417, %v415
  %v642 = vpack.c.b16 %v418, %v416
  %v643 = vpack.c.b16 %v421, %v419
  %v644 = vpack.c.b16 %v422, %v420
  %v645 = vpack.c.b16 %v425, %v423
  %v646 = vpack.c.b16 %v426, %v424
  %v647 = vpack.c.b16 %v429, %v427
  %v648 = vpack.c.b16 %v430, %v428
  %v649 = vpack.c.b16 %v433, %v431
  %v650 = vpack.c.b16 %v434, %v432
  %v651 = vpack.c.b16 %v437, %v435
  %v652 = vpack.c.b16 %v438, %v436
  %v653 = vpack.c.b16 %v441, %v439
  %v654 = vpack.c.b16 %v442, %v440
  %v655 = vpack.c.b16 %v445, %v443
  %v656 = vpack.c.b16 %v446, %v444
  %v657 = vpack.c.b16 %v449, %v447
  %v658 = vpack.c.b16 %v450, %v448
  %v659 = vpack.c.b16 %v453, %v451
  %v660 = vpack.c.b16 %v454, %v452
  %v661 = vpack.c.b16 %v457, %v455
  %v662 = vpack.c.b16 %v458, %v456
  %v663 = vpack.c.b16 %v461, %v459
  %v664 = vpack.c.b16 %v462, %v460
  %v665 = vpack.c.b16 %v465, %v463
  %v666 = vpack.c.b16 %v466, %v464
  %v667 = vpack.c.b16 %v469, %v467
  %v668 = vpack.c.b16 %v470, %v468
  %v669 = vpack.c.b16 %v473, %v471
  %v670 = vpack.c.b16 %v474, %v472
  %v671 = vpack.c.b16 %v477, %v475
  %v672 = vpack.c.b16 %v478, %v476
  %v673 = vpack.c.b16 %v481, %v479
  %v674 = vpack.c.b16 %v482, %v480
  %v675 = vpack.c.b16 %v485, %v483
  %v676 = vpack.c.b16 %v486, %v484
  %v677 = vpack.c.b16 %v489, %v487
  %v678 = vpack.c.b16 %v490, %v488
  %v679 = vpack.c.b16 %v493, %v491
  %v680 = vpack.c.b16 %v494, %v492
  %v681 = vpack.c.b16 %v497, %v495
  %v682 = vpack.c.b16 %v498, %v496
  %v683 = vpack.c.b16 %v501, %v499
  %v684 = vpack.c.b16 %v502, %v500
  %v685 = vpack.c.b16 %v505, %v503
  %v686 = vpack.c.b16 %v506, %v504
  %v687 = vpack.c.b16 %v509, %v507
  %v688 = vpack.c.b16 %v510, %v508
  %v689 = vpack.c.b16 %v513, %v511
  %v690 = vpack.c.b16 %v514, %v512
  %v691 = vpack.c.b16 %v517, %v515
  %v692 = vpack.c.b16 %v518, %v516
  %v693 = vpack.c.b16 %v521, %v519
  %v694 = vpack.c.b16 %v522, %v520
  %v695 = vpack.c.b16 %v525, %v523
  %v696 = vpack.c.b16 %v526, %v524
  %v697 = vpack.c.b16 %v529, %v527
  %v698 = vpack.c.b16 %v530, %v528
  %v699 = vpack.c.b16 %v533, %v531
  %v700 = vpack.c.b16 %v534, %v532
  %v701 = vpack.c.b16 %v537, %v535
  %v702 = vpack.c.b16 %v538, %v536
  %v703 = vpack.c.b16 %v541, %v539
  %v704 = vpack.c.b16 %v542, %v540
  %v705 = vpack.c.b16 %v545, %v543
  %v706 = vpack.c.b16 %v546, %v544
  %v707 = vpack.c.b16 %v549, %v547
  %v708 = vpack.c.b16 %v550, %v548
  %v709 = vpack.c.b16 %v553, %v551
  %v710 = vpack.c.b16 %v554, %v552
  %v711 = vpack.c.b16 %v557, %v555
  %v712 = vpack.c.b16 %v558, %v556
  %v713 = vpack.c.b16 %v561, %v559
  %v714 = vpack.c.b16 %v562, %v560
  %v715 = vpack.c.b16 %v565, %v563
  %v716 = vpack.c.b16 %v566, %v564
  %v717 = vpack.c.b16 %v569, %v567
  %v718 = vpack.c.b16 %v570, %v568
  %v719 = vpack.c.b16 %v573, %v571
  %v720 = vpack.c.b16 %v574, %v572
  %v721 = vpack.c.b16 %v577, %v575
  %v722 = vpack.c.b16 %v578, %v576
  %v723 = vpack.c.b16 %v581, %v579
  %v724 = vpack.c.b16 %v582, %v580
  %v725 = vpack.c.b16 %v585, %v583
  %v726 = vpack.c.b16 %v586, %v584
  %v727 = vpack.c.b16 %v589, %v587
  %v728 = vpack.c.b16 %v590, %v588
  %v729 = vpack.c.b16 %v593, %v591
  %v730 = vpack.c.b16 %v594, %v592
  %v731 = vpack.c.b16 %v597, %v595
  %v732 = vpack.c.b16 %v598, %v596
  %v733 = vpack.c.b16 %v601, %v599
  %v734 = vpack.c.b16 %v602, %v600
  %v735 = vpack.c.b16 %v605, %v603
  %v736 = vpack.c.b16 %v606, %v604
  %v737 = vpack.c.b16 %v609, %v607
  %v738 = vpack.c.b16 %v610, %v608
  %867 = vmatprep.subr.bf16.mxu0 %v612
  %868 = vmatpush1.bf16.msra.mxu0 %v611
  %869 = vmatprep.subr.bf16.mxu0 %v614
  %870 = vmatpush1.bf16.msra.mxu0 %v613
  %871 = vmatprep.subr.bf16.mxu0 %v616
  %872 = vmatpush1.bf16.msra.mxu0 %v615
  %873 = vmatprep.subr.bf16.mxu0 %v618
  %874 = vmatpush1.bf16.msra.mxu0 %v617
  %875 = vmatprep.subr.bf16.mxu0 %v620
  %876 = vmatpush1.bf16.msra.mxu0 %v619
  %877 = vmatprep.subr.bf16.mxu0 %v622
  %878 = vmatpush1.bf16.msra.mxu0 %v621
  %879 = vmatprep.subr.bf16.mxu0 %v624
  %880 = vmatpush1.bf16.msra.mxu0 %v623
  %881 = vmatprep.subr.bf16.mxu0 %v626
  %882 = vmatpush1.bf16.msra.mxu0 %v625
  %883 = vmatprep.subr.bf16.mxu0 %v628
  %884 = vmatpush1.bf16.msra.mxu0 %v627
  %885 = vmatprep.subr.bf16.mxu0 %v630
  %886 = vmatpush1.bf16.msra.mxu0 %v629
  %887 = vmatprep.subr.bf16.mxu0 %v632
  %888 = vmatpush1.bf16.msra.mxu0 %v631
  %889 = vmatprep.subr.bf16.mxu0 %v634
  %890 = vmatpush1.bf16.msra.mxu0 %v633
  %891 = vmatprep.subr.bf16.mxu0 %v636
  %892 = vmatpush1.bf16.msra.mxu0 %v635
  %893 = vmatprep.subr.bf16.mxu0 %v638
  %894 = vmatpush1.bf16.msra.mxu0 %v637
  %895 = vmatprep.subr.bf16.mxu0 %v640
  %896 = vmatpush1.bf16.msra.mxu0 %v639
  %897 = vmatprep.subr.bf16.mxu0 %v642
  %898 = vmatpush1.bf16.msra.mxu0 %v641
  %899 = vmatprep.mubr.bf16.mxu0 %v80
  %900 = vmatmul.mubr.bf16.gmra.mrb[0].mxu0 %v79
  %v901 = vpop.f32.mrb[0].mxu0
  %v902 = vadd.f32 %v220, %v901
  %v903 = vpop.f32.mrb[0].mxu0
  %v904 = vadd.f32 %v224, %v903
  %v905 = vpop.f32.mrb[0].mxu0
  %v906 = vpop.f32.mrb[0].mxu0
  %907 = vdwg.mxu0
  %908 = vmatprep.subr.bf16.mxu0 %v644
  %909 = vmatpush1.bf16.msra.mxu0 %v643
  %910 = vmatprep.subr.bf16.mxu0 %v646
  %911 = vmatpush1.bf16.msra.mxu0 %v645
  %912 = vmatprep.subr.bf16.mxu0 %v648
  %913 = vmatpush1.bf16.msra.mxu0 %v647
  %914 = vmatprep.subr.bf16.mxu0 %v650
  %915 = vmatpush1.bf16.msra.mxu0 %v649
  %916 = vmatprep.subr.bf16.mxu0 %v652
  %917 = vmatpush1.bf16.msra.mxu0 %v651
  %918 = vmatprep.subr.bf16.mxu0 %v654
  %919 = vmatpush1.bf16.msra.mxu0 %v653
  %920 = vmatprep.subr.bf16.mxu0 %v656
  %921 = vmatpush1.bf16.msra.mxu0 %v655
  %922 = vmatprep.subr.bf16.mxu0 %v658
  %923 = vmatpush1.bf16.msra.mxu0 %v657
  %924 = vmatprep.subr.bf16.mxu0 %v660
  %925 = vmatpush1.bf16.msra.mxu0 %v659
  %926 = vmatprep.subr.bf16.mxu0 %v662
  %927 = vmatpush1.bf16.msra.mxu0 %v661
  %928 = vmatprep.subr.bf16.mxu0 %v664
  %929 = vmatpush1.bf16.msra.mxu0 %v663
  %930 = vmatprep.subr.bf16.mxu0 %v666
  %931 = vmatpush1.bf16.msra.mxu0 %v665
  %932 = vmatprep.subr.bf16.mxu0 %v668
  %933 = vmatpush1.bf16.msra.mxu0 %v667
  %934 = vmatprep.subr.bf16.mxu0 %v670
  %935 = vmatpush1.bf16.msra.mxu0 %v669
  %936 = vmatprep.subr.bf16.mxu0 %v672
  %937 = vmatpush1.bf16.msra.mxu0 %v671
  %938 = vmatprep.subr.bf16.mxu0 %v674
  %939 = vmatpush1.bf16.msra.mxu0 %v673
  %940 = vmatprep.mubr.bf16.mxu0 %v82
  %941 = vmatmul.mubr.bf16.gmra.mrb[0].mxu0 %v81
  %v942 = vpop.f32.mrb[0].mxu0
  %v943 = vadd.f32 %v902, %v942
  %v944 = vpop.f32.mrb[0].mxu0
  %v945 = vadd.f32 %v904, %v944
  %v946 = vpop.f32.mrb[0].mxu0
  %v947 = vpop.f32.mrb[0].mxu0
  %948 = vdwg.mxu0
  %949 = vmatprep.subr.bf16.mxu0 %v676
  %950 = vmatpush1.bf16.msra.mxu0 %v675
  %951 = vmatprep.subr.bf16.mxu0 %v678
  %952 = vmatpush1.bf16.msra.mxu0 %v677
  %953 = vmatprep.subr.bf16.mxu0 %v680
  %954 = vmatpush1.bf16.msra.mxu0 %v679
  %955 = vmatprep.subr.bf16.mxu0 %v682
  %956 = vmatpush1.bf16.msra.mxu0 %v681
  %957 = vmatprep.subr.bf16.mxu0 %v684
  %958 = vmatpush1.bf16.msra.mxu0 %v683
  %959 = vmatprep.subr.bf16.mxu0 %v686
  %960 = vmatpush1.bf16.msra.mxu0 %v685
  %961 = vmatprep.subr.bf16.mxu0 %v688
  %962 = vmatpush1.bf16.msra.mxu0 %v687
  %963 = vmatprep.subr.bf16.mxu0 %v690
  %964 = vmatpush1.bf16.msra.mxu0 %v689
  %965 = vmatprep.subr.bf16.mxu0 %v692
  %966 = vmatpush1.bf16.msra.mxu0 %v691
  %967 = vmatprep.subr.bf16.mxu0 %v694
  %968 = vmatpush1.bf16.msra.mxu0 %v693
  %969 = vmatprep.subr.bf16.mxu0 %v696
  %970 = vmatpush1.bf16.msra.mxu0 %v695
  %971 = vmatprep.subr.bf16.mxu0 %v698
  %972 = vmatpush1.bf16.msra.mxu0 %v697
  %973 = vmatprep.subr.bf16.mxu0 %v700
  %974 = vmatpush1.bf16.msra.mxu0 %v699
  %975 = vmatprep.subr.bf16.mxu0 %v702
  %976 = vmatpush1.bf16.msra.mxu0 %v701
  %977 = vmatprep.subr.bf16.mxu0 %v704
  %978 = vmatpush1.bf16.msra.mxu0 %v703
  %979 = vmatprep.subr.bf16.mxu0 %v706
  %980 = vmatpush1.bf16.msra.mxu0 %v705
  %981 = vmatprep.mubr.bf16.mxu0 %v84
  %982 = vmatmul.mubr.bf16.gmra.mrb[0].mxu0 %v83
  %v983 = vpop.f32.mrb[0].mxu0
  %v984 = vadd.f32 %v943, %v983
  %v985 = vpop.f32.mrb[0].mxu0
  %v986 = vadd.f32 %v945, %v985
  %v987 = vpop.f32.mrb[0].mxu0
  %v988 = vpop.f32.mrb[0].mxu0
  %989 = vdwg.mxu0
  %990 = vmatprep.subr.bf16.mxu0 %v708
  %991 = vmatpush1.bf16.msra.mxu0 %v707
  %992 = vmatprep.subr.bf16.mxu0 %v710
  %993 = vmatpush1.bf16.msra.mxu0 %v709
  %994 = vmatprep.subr.bf16.mxu0 %v712
  %995 = vmatpush1.bf16.msra.mxu0 %v711
  %996 = vmatprep.subr.bf16.mxu0 %v714
  %997 = vmatpush1.bf16.msra.mxu0 %v713
  %998 = vmatprep.subr.bf16.mxu0 %v716
  %999 = vmatpush1.bf16.msra.mxu0 %v715
  %1000 = vmatprep.subr.bf16.mxu0 %v718
  %1001 = vmatpush1.bf16.msra.mxu0 %v717
  %1002 = vmatprep.subr.bf16.mxu0 %v720
  %1003 = vmatpush1.bf16.msra.mxu0 %v719
  %1004 = vmatprep.subr.bf16.mxu0 %v722
  %1005 = vmatpush1.bf16.msra.mxu0 %v721
  %1006 = vmatprep.subr.bf16.mxu0 %v724
  %1007 = vmatpush1.bf16.msra.mxu0 %v723
  %1008 = vmatprep.subr.bf16.mxu0 %v726
  %1009 = vmatpush1.bf16.msra.mxu0 %v725
  %1010 = vmatprep.subr.bf16.mxu0 %v728
  %1011 = vmatpush1.bf16.msra.mxu0 %v727
  %1012 = vmatprep.subr.bf16.mxu0 %v730
  %1013 = vmatpush1.bf16.msra.mxu0 %v729
  %1014 = vmatprep.subr.bf16.mxu0 %v732
  %1015 = vmatpush1.bf16.msra.mxu0 %v731
  %1016 = vmatprep.subr.bf16.mxu0 %v734
  %1017 = vmatpush1.bf16.msra.mxu0 %v733
  %1018 = vmatprep.subr.bf16.mxu0 %v736
  %1019 = vmatpush1.bf16.msra.mxu0 %v735
  %1020 = vmatprep.subr.bf16.mxu0 %v738
  %1021 = vmatpush1.bf16.msra.mxu0 %v737
  %1022 = vmatprep.mubr.bf16.mxu0 %v86
  %1023 = vmatmul.mubr.bf16.gmra.mrb[0].mxu0 %v85
  %v1024 = vpop.f32.mrb[0].mxu0
  %v1025 = vadd.f32 %v984, %v1024
  %v1026 = vpop.f32.mrb[0].mxu0
  %v1027 = vadd.f32 %v986, %v1026
  %v1028 = vpop.f32.mrb[0].mxu0
  %v1029 = vpop.f32.mrb[0].mxu0
  %1030 = vdwg.mxu0
  %v1031 = vmax.f32 %v1025, 0.0
  %v1032 = vmax.f32 %v1027, 0.0
  %v1033 = vpack.c.bf16 %v1031, %v1031
  %v1034 = vpack.c.bf16 %v1032, %v1032
  %v1035 = vld [vmem:[%s3] sm:$0xf]
  %v1036 = vld [vmem:[%s3 + $0x4] sm:$0xf]
  %v1037 = vld [vmem:[%s3 + $0x8] sm:$0xf]
  %v1038 = vld [vmem:[%s3 + $0xc] sm:$0xf]
  %v1039 = vld [vmem:[%s3 + $0x10] sm:$0xf]
  %v1040 = vld [vmem:[%s3 + $0x14] sm:$0xf]
  %v1041 = vld [vmem:[%s3 + $0x18] sm:$0xf]
  %v1042 = vld [vmem:[%s3 + $0x1c] sm:$0xf]
  %v1043 = vld [vmem:[%s3 + $0x20] sm:$0xf]
  %v1044 = vld [vmem:[%s3 + $0x24] sm:$0xf]
  %v1045 = vld [vmem:[%s3 + $0x28] sm:$0xf]
  %v1046 = vld [vmem:[%s3 + $0x2c] sm:$0xf]
  %v1047 = vld [vmem:[%s3 + $0x30] sm:$0xf]
  %v1048 = vld [vmem:[%s3 + $0x34] sm:$0xf]
  %v1049 = vld [vmem:[%s3 + $0x38] sm:$0xf]
  %v1050 = vld [vmem:[%s3 + $0x3c] sm:$0xf]
  %v1051 = vld [vmem:[%s3 + $0x40] sm:$0xf]
  %v1052 = vld [vmem:[%s3 + $0x44] sm:$0xf]
  %v1053 = vld [vmem:[%s3 + $0x48] sm:$0xf]
  %v1054 = vld [vmem:[%s3 + $0x4c] sm:$0xf]
  %v1055 = vld [vmem:[%s3 + $0x50] sm:$0xf]
  %v1056 = vld [vmem:[%s3 + $0x54] sm:$0xf]
  %v1057 = vld [vmem:[%s3 + $0x58] sm:$0xf]
  %v1058 = vld [vmem:[%s3 + $0x5c] sm:$0xf]
  %v1059 = vld [vmem:[%s3 + $0x60] sm:$0xf]
  %v1060 = vld [vmem:[%s3 + $0x64] sm:$0xf]
  %v1061 = vld [vmem:[%s3 + $0x68] sm:$0xf]
  %v1062 = vld [vmem:[%s3 + $0x6c] sm:$0xf]
  %v1063 = vld [vmem:[%s3 + $0x70] sm:$0xf]
  %v1064 = vld [vmem:[%s3 + $0x74] sm:$0xf]
  %v1065 = vld [vmem:[%s3 + $0x78] sm:$0xf]
  %v1066 = vld [vmem:[%s3 + $0x7c] sm:$0xf]
  %v1067 = vld [vmem:[%s4] sm:$0x1]
  %v1069 = vlaneseq
  %v1070 = vshrl.u32 %v1069, 7
  %v1071 = vsub.s32 0, %v1070
  %v1072 = vrot.slane %v1067, %v1071
  %v1106 = vunpack.c.l.b16 %v1035
  %v1107 = vunpack.c.l.b16 %v1036
  %v1108 = vunpack.c.l.b16 %v1037
  %v1109 = vunpack.c.l.b16 %v1038
  %v1110 = vunpack.c.l.b16 %v1039
  %v1111 = vunpack.c.l.b16 %v1040
  %v1112 = vunpack.c.l.b16 %v1041
  %v1113 = vunpack.c.l.b16 %v1042
  %v1114 = vunpack.c.l.b16 %v1043
  %v1115 = vunpack.c.l.b16 %v1044
  %v1116 = vunpack.c.l.b16 %v1045
  %v1117 = vunpack.c.l.b16 %v1046
  %v1118 = vunpack.c.l.b16 %v1047
  %v1119 = vunpack.c.l.b16 %v1048
  %v1120 = vunpack.c.l.b16 %v1049
  %v1121 = vunpack.c.l.b16 %v1050
  %v1122 = vunpack.c.l.b16 %v1051
  %v1123 = vunpack.c.l.b16 %v1052
  %v1124 = vunpack.c.l.b16 %v1053
  %v1125 = vunpack.c.l.b16 %v1054
  %v1126 = vunpack.c.l.b16 %v1055
  %v1127 = vunpack.c.l.b16 %v1056
  %v1128 = vunpack.c.l.b16 %v1057
  %v1129 = vunpack.c.l.b16 %v1058
  %v1130 = vunpack.c.l.b16 %v1059
  %v1131 = vunpack.c.l.b16 %v1060
  %v1132 = vunpack.c.l.b16 %v1061
  %v1133 = vunpack.c.l.b16 %v1062
  %v1134 = vunpack.c.l.b16 %v1063
  %v1135 = vunpack.c.l.b16 %v1064
  %v1136 = vunpack.c.l.b16 %v1065
  %v1137 = vunpack.c.l.b16 %v1066
  %v1138 = vpack.c.b16 %v1107, %v1106
  %v1139 = vpack.c.b16 %v1109, %v1108
  %v1140 = vpack.c.b16 %v1111, %v1110
  %v1141 = vpack.c.b16 %v1113, %v1112
  %v1142 = vpack.c.b16 %v1115, %v1114
  %v1143 = vpack.c.b16 %v1117, %v1116
  %v1144 = vpack.c.b16 %v1119, %v1118
  %v1145 = vpack.c.b16 %v1121, %v1120
  %v1146 = vpack.c.b16 %v1123, %v1122
  %v1147 = vpack.c.b16 %v1125, %v1124
  %v1148 = vpack.c.b16 %v1127, %v1126
  %v1149 = vpack.c.b16 %v1129, %v1128
  %v1150 = vpack.c.b16 %v1131, %v1130
  %v1151 = vpack.c.b16 %v1133, %v1132
  %v1152 = vpack.c.b16 %v1135, %v1134
  %v1153 = vpack.c.b16 %v1137, %v1136
  %1170 = vmatprep.subr.bf16.mxu0 0
  %1171 = vmatpush1.bf16.msra.mxu0 %v1138
  %1172 = vmatprep.subr.bf16.mxu0 0
  %1173 = vmatpush1.bf16.msra.mxu0 %v1139
  %1174 = vmatprep.subr.bf16.mxu0 0
  %1175 = vmatpush1.bf16.msra.mxu0 %v1140
  %1176 = vmatprep.subr.bf16.mxu0 0
  %1177 = vmatpush1.bf16.msra.mxu0 %v1141
  %1178 = vmatprep.subr.bf16.mxu0 0
  %1179 = vmatpush1.bf16.msra.mxu0 %v1142
  %1180 = vmatprep.subr.bf16.mxu0 0
  %1181 = vmatpush1.bf16.msra.mxu0 %v1143
  %1182 = vmatprep.subr.bf16.mxu0 0
  %1183 = vmatpush1.bf16.msra.mxu0 %v1144
  %1184 = vmatprep.subr.bf16.mxu0 0
  %1185 = vmatpush1.bf16.msra.mxu0 %v1145
  %1186 = vmatprep.subr.bf16.mxu0 0
  %1187 = vmatpush1.bf16.msra.mxu0 %v1146
  %1188 = vmatprep.subr.bf16.mxu0 0
  %1189 = vmatpush1.bf16.msra.mxu0 %v1147
  %1190 = vmatprep.subr.bf16.mxu0 0
  %1191 = vmatpush1.bf16.msra.mxu0 %v1148
  %1192 = vmatprep.subr.bf16.mxu0 0
  %1193 = vmatpush1.bf16.msra.mxu0 %v1149
  %1194 = vmatprep.subr.bf16.mxu0 0
  %1195 = vmatpush1.bf16.msra.mxu0 %v1150
  %1196 = vmatprep.subr.bf16.mxu0 0
  %1197 = vmatpush1.bf16.msra.mxu0 %v1151
  %1198 = vmatprep.subr.bf16.mxu0 0
  %1199 = vmatpush1.bf16.msra.mxu0 %v1152
  %1200 = vmatprep.subr.bf16.mxu0 0
  %1201 = vmatpush1.bf16.msra.mxu0 %v1153
  %1202 = vmatprep.mubr.bf16.mxu0 %v1034
  %1203 = vmatmul.mubr.bf16.gmra.mrb[0].mxu0 %v1033
  %v1204 = vpop.f32.mrb[0].mxu0
  %v1205 = vadd.f32 %v1072, %v1204
  %v1206 = vpop.f32.mrb[0].mxu0
  %v1207 = vpop.f32.mrb[0].mxu0
  %v1208 = vpop.f32.mrb[0].mxu0
  %1209 = vdwg.mxu0
  %v1210 = vmax.f32 %v1205, 0.0
  %v1211 = vpack.c.bf16 %v1210, %v1210
  %v1212 = vld [vmem:[%s5] sm:$0xf]
  %v1213 = vld [vmem:[%s5 + $0x4] sm:$0xf]
  %v1214 = vld [vmem:[%s5 + $0x8] sm:$0xf]
  %v1215 = vld [vmem:[%s5 + $0xc] sm:$0xf]
  %v1216 = vld [vmem:[%s5 + $0x10] sm:$0xf]
  %v1217 = vld [vmem:[%s5 + $0x14] sm:$0xf]
  %v1218 = vld [vmem:[%s5 + $0x18] sm:$0xf]
  %v1219 = vld [vmem:[%s5 + $0x1c] sm:$0xf]
  %v1220 = vld [vmem:[%s5 + $0x20] sm:$0xf]
  %v1221 = vld [vmem:[%s5 + $0x24] sm:$0xf]
  %v1222 = vld [vmem:[%s5 + $0x28] sm:$0xf]
  %v1223 = vld [vmem:[%s5 + $0x2c] sm:$0xf]
  %v1224 = vld [vmem:[%s5 + $0x30] sm:$0xf]
  %v1225 = vld [vmem:[%s5 + $0x34] sm:$0xf]
  %v1226 = vld [vmem:[%s5 + $0x38] sm:$0xf]
  %v1227 = vld [vmem:[%s5 + $0x3c] sm:$0xf]
  %v1228 = vld [vmem:[%s6] sm:$0x1]
  %v1230 = vlaneseq
  %v1231 = vshrl.u32 %v1230, 7
  %v1232 = vsub.s32 0, %v1231
  %v1233 = vrot.slane %v1228, %v1232
  %v1251 = vunpack.c.l.b16 %v1212
  %v1252 = vunpack.c.l.b16 %v1213
  %v1253 = vunpack.c.l.b16 %v1214
  %v1254 = vunpack.c.l.b16 %v1215
  %v1255 = vunpack.c.l.b16 %v1216
  %v1256 = vunpack.c.l.b16 %v1217
  %v1257 = vunpack.c.l.b16 %v1218
  %v1258 = vunpack.c.l.b16 %v1219
  %v1259 = vunpack.c.l.b16 %v1220
  %v1260 = vunpack.c.l.b16 %v1221
  %v1261 = vunpack.c.l.b16 %v1222
  %v1262 = vunpack.c.l.b16 %v1223
  %v1263 = vunpack.c.l.b16 %v1224
  %v1264 = vunpack.c.l.b16 %v1225
  %v1265 = vunpack.c.l.b16 %v1226
  %v1266 = vunpack.c.l.b16 %v1227
  %v1267 = vpack.c.b16 %v1252, %v1251
  %v1268 = vpack.c.b16 %v1254, %v1253
  %v1269 = vpack.c.b16 %v1256, %v1255
  %v1270 = vpack.c.b16 %v1258, %v1257
  %v1271 = vpack.c.b16 %v1260, %v1259
  %v1272 = vpack.c.b16 %v1262, %v1261
  %v1273 = vpack.c.b16 %v1264, %v1263
  %v1274 = vpack.c.b16 %v1266, %v1265
  %1283 = vmatprep.subr.bf16.mxu0 0
  %1284 = vmatpush1.bf16.msra.mxu0 %v1267
  %1285 = vmatprep.subr.bf16.mxu0 0
  %1286 = vmatpush1.bf16.msra.mxu0 %v1268
  %1287 = vmatprep.subr.bf16.mxu0 0
  %1288 = vmatpush1.bf16.msra.mxu0 %v1269
  %1289 = vmatprep.subr.bf16.mxu0 0
  %1290 = vmatpush1.bf16.msra.mxu0 %v1270
  %1291 = vmatprep.subr.bf16.mxu0 0
  %1292 = vmatpush1.bf16.msra.mxu0 %v1271
  %1293 = vmatprep.subr.bf16.mxu0 0
  %1294 = vmatpush1.bf16.msra.mxu0 %v1272
  %1295 = vmatprep.subr.bf16.mxu0 0
  %1296 = vmatpush1.bf16.msra.mxu0 %v1273
  %1297 = vmatprep.subr.bf16.mxu0 0
  %1298 = vmatpush1.bf16.msra.mxu0 %v1274
  %1299 = vmatprep.subr.bf16.mxu0 0
  %1300 = vmatpush1.bf16.msra.mxu0 0
  %1301 = vmatprep.subr.bf16.mxu0 0
  %1302 = vmatpush1.bf16.msra.mxu0 0
  %1303 = vmatprep.subr.bf16.mxu0 0
  %1304 = vmatpush1.bf16.msra.mxu0 0
  %1305 = vmatprep.subr.bf16.mxu0 0
  %1306 = vmatpush1.bf16.msra.mxu0 0
  %1307 = vmatprep.subr.bf16.mxu0 0
  %1308 = vmatpush1.bf16.msra.mxu0 0
  %1309 = vmatprep.subr.bf16.mxu0 0
  %1310 = vmatpush1.bf16.msra.mxu0 0
  %1311 = vmatprep.subr.bf16.mxu0 0
  %1312 = vmatpush1.bf16.msra.mxu0 0
  %1313 = vmatprep.subr.bf16.mxu0 0
  %1314 = vmatpush1.bf16.msra.mxu0 0
  %1315 = vmatprep.mubr.bf16.mxu0 0
  %1316 = vmatmul.mubr.bf16.gmra.mrb[0].mxu0 %v1211
  %v1317 = vpop.f32.mrb[0].mxu0
  %v1318 = vadd.f32 %v1233, %v1317
  %v1319 = vpop.f32.mrb[0].mxu0
  %v1320 = vpop.f32.mrb[0].mxu0
  %v1321 = vpop.f32.mrb[0].mxu0
  %1322 = vdwg.mxu0
  %v1323 = vmax.f32 %v1318, 0.0
  %v1324 = vpack.c.bf16 %v1323, %v1323
  %v1325 = vld [vmem:[%s7] sm:$0xf]
  %v1326 = vld [vmem:[%s7 + $0x4] sm:$0xf]
  %v1327 = vld [vmem:[%s7 + $0x8] sm:$0xf]
  %v1328 = vld [vmem:[%s7 + $0xc] sm:$0xf]
  %v1329 = vld [vmem:[%s7 + $0x10] sm:$0xf]
  %v1330 = vld [vmem:[%s7 + $0x14] sm:$0xf]
  %v1331 = vld [vmem:[%s7 + $0x18] sm:$0xf]
  %v1332 = vld [vmem:[%s7 + $0x1c] sm:$0xf]
  %v1333 = vld [vmem:[%s7 + $0x20] sm:$0xf]
  %v1334 = vld [vmem:[%s7 + $0x24] sm:$0xf]
  %v1335 = vld [vmem:[%s7 + $0x28] sm:$0xf]
  %v1336 = vld [vmem:[%s7 + $0x2c] sm:$0xf]
  %v1337 = vld [vmem:[%s7 + $0x30] sm:$0xf]
  %v1338 = vld [vmem:[%s7 + $0x34] sm:$0xf]
  %v1339 = vld [vmem:[%s7 + $0x38] sm:$0xf]
  %v1340 = vld [vmem:[%s7 + $0x3c] sm:$0xf]
  %v1341 = vld [vmem:[%s8] sm:$0x1]
  %v1343 = vlaneseq
  %v1344 = vshrl.u32 %v1343, 7
  %v1345 = vsub.s32 0, %v1344
  %v1346 = vrot.slane %v1341, %v1345
  %v1364 = vunpack.c.l.b16 %v1325
  %v1365 = vunpack.c.l.b16 %v1326
  %v1366 = vunpack.c.l.b16 %v1327
  %v1367 = vunpack.c.l.b16 %v1328
  %v1368 = vunpack.c.l.b16 %v1329
  %v1369 = vunpack.c.l.b16 %v1330
  %v1370 = vunpack.c.l.b16 %v1331
  %v1371 = vunpack.c.l.b16 %v1332
  %v1372 = vunpack.c.l.b16 %v1333
  %v1373 = vunpack.c.l.b16 %v1334
  %v1374 = vunpack.c.l.b16 %v1335
  %v1375 = vunpack.c.l.b16 %v1336
  %v1376 = vunpack.c.l.b16 %v1337
  %v1377 = vunpack.c.l.b16 %v1338
  %v1378 = vunpack.c.l.b16 %v1339
  %v1379 = vunpack.c.l.b16 %v1340
  %v1380 = vpack.c.b16 %v1365, %v1364
  %v1381 = vpack.c.b16 %v1367, %v1366
  %v1382 = vpack.c.b16 %v1369, %v1368
  %v1383 = vpack.c.b16 %v1371, %v1370
  %v1384 = vpack.c.b16 %v1373, %v1372
  %v1385 = vpack.c.b16 %v1375, %v1374
  %v1386 = vpack.c.b16 %v1377, %v1376
  %v1387 = vpack.c.b16 %v1379, %v1378
  %1396 = vmatprep.subr.bf16.mxu0 0
  %1397 = vmatpush1.bf16.msra.mxu0 %v1380
  %1398 = vmatprep.subr.bf16.mxu0 0
  %1399 = vmatpush1.bf16.msra.mxu0 %v1381
  %1400 = vmatprep.subr.bf16.mxu0 0
  %1401 = vmatpush1.bf16.msra.mxu0 %v1382
  %1402 = vmatprep.subr.bf16.mxu0 0
  %1403 = vmatpush1.bf16.msra.mxu0 %v1383
  %1404 = vmatprep.subr.bf16.mxu0 0
  %1405 = vmatpush1.bf16.msra.mxu0 %v1384
  %1406 = vmatprep.subr.bf16.mxu0 0
  %1407 = vmatpush1.bf16.msra.mxu0 %v1385
  %1408 = vmatprep.subr.bf16.mxu0 0
  %1409 = vmatpush1.bf16.msra.mxu0 %v1386
  %1410 = vmatprep.subr.bf16.mxu0 0
  %1411 = vmatpush1.bf16.msra.mxu0 %v1387
  %1412 = vmatprep.subr.bf16.mxu0 0
  %1413 = vmatpush1.bf16.msra.mxu0 0
  %1414 = vmatprep.subr.bf16.mxu0 0
  %1415 = vmatpush1.bf16.msra.mxu0 0
  %1416 = vmatprep.subr.bf16.mxu0 0
  %1417 = vmatpush1.bf16.msra.mxu0 0
  %1418 = vmatprep.subr.bf16.mxu0 0
  %1419 = vmatpush1.bf16.msra.mxu0 0
  %1420 = vmatprep.subr.bf16.mxu0 0
  %1421 = vmatpush1.bf16.msra.mxu0 0
  %1422 = vmatprep.subr.bf16.mxu0 0
  %1423 = vmatpush1.bf16.msra.mxu0 0
  %1424 = vmatprep.subr.bf16.mxu0 0
  %1425 = vmatpush1.bf16.msra.mxu0 0
  %1426 = vmatprep.subr.bf16.mxu0 0
  %1427 = vmatpush1.bf16.msra.mxu0 0
  %1428 = vmatprep.mubr.bf16.mxu0 0
  %1429 = vmatmul.mubr.bf16.gmra.mrb[0].mxu0 %v1324
  %v1430 = vpop.f32.mrb[0].mxu0
  %v1431 = vadd.f32 %v1346, %v1430
  %v1432 = vpop.f32.mrb[0].mxu0
  %v1433 = vpop.f32.mrb[0].mxu0
  %v1434 = vpop.f32.mrb[0].mxu0
  %1435 = vdwg.mxu0
  %vm1436 = vcmask 1041408
  %v1437 = vsel %vm1436, %v1431, -inf
  %1438 = vmax.xlane.f32.xlu0 %v1437
  %v1439 = vpop.xlane.xlu0 %1438
  %v1440 = vsub.f32 %v1431, %v1439
  %v1441 = vmul.f32 %v1440, 1.442695
  %v1442 = vpow.pop %v1441
  %v1443 = vsel %vm1436, %v1442, 0.0
  %1444 = vadd.xlane.f32.xlu0 %v1443
  %v1445 = vpop.xlane.xlu0 %1444
  %v1446 = vlog2.pop %v1445
  %v1447 = vmul.f32 %v1446, 0.6931472
  %v1448 = vsub.f32 %v1440, %v1447
  %v1449 = vpack.c.bf16 %v1448, %v1448
  %1450 = vst [vmem:[%s9] sm:$0x1] %v1449
  // Predicated region
  $region38: #{classifieur_forward.1} parent=0 // pred_check
    _
  $region39: #{classifieur_forward.1} parent=0 // pred_check_branch
    %1452 = sbr.rel (0) target = $region41
  $region40: #{classifieur_forward.1} parent=0 // pred_region
    _
  $region41: #{classifieur_forward.1} parent=0 // pred_fallthru
    _
  // Predicated region
  $region42: #{classifieur_forward.1} parent=0 // pred_check
    _
  $region43: #{classifieur_forward.1} parent=0 // pred_check_branch
    %1454 = sbr.rel (0) target = $region45
  $region44: #{classifieur_forward.1} parent=0 // pred_region
    _
  $region45: #{classifieur_forward.1} parent=0 // pred_fallthru
    _

</llo_original>
